<compile_context>
chip_gen: v6e
topology: v6e:2x2x1
jax: 0.10.0
libtpu: 0.0.40
codegen_flags: <defaults>
</compile_context>

<pallas_src>
import functools

import jax
import jax.numpy as jnp
from jax.experimental import pallas as pl
from jax.experimental.pallas import tpu as pltpu

EPS = 1e-5
F1, F2, F3 = 512, 256, 128            # fc1 / fc2 / fc3 output widths

# Offsets of the packed per-feature vectors in the (1, _VEC_W) slab.
_OFF_G1 = 0
_OFF_B1 = F1
_OFF_G2 = 2 * F1
_OFF_B2 = 2 * F1 + F2
_OFF_B3 = 2 * F1 + 2 * F2
_VEC_W = 2 * F1 + 2 * F2 + F3         # 1664 = 13 * 128 (lane aligned)

FUSED_MAX_BATCH = 512                 # gridless path VMEM-safe on v5e/v6e/v7x
DEFAULT_TB = 512                      # batch tile for the gridded path


# ----------------------------------------------------------------------------
# Fused, gridless kernel (small batch: whole problem resident in VMEM).
# ----------------------------------------------------------------------------
def _bn_relu_fused(h, gamma, beta):
    # One-pass batch stats + folded affine.
    mean = jnp.mean(h, axis=0, keepdims=True)
    meansq = jnp.mean(h * h, axis=0, keepdims=True)
    var = meansq - mean * mean
    scale = gamma * jax.lax.rsqrt(var + EPS)          # (1, F)
    shift = beta - mean * scale                       # (1, F)
    return jnp.maximum(h * scale + shift, 0.0)


def _fused_kernel(x_ref, w1_ref, w2_ref, w3_ref, vec_ref, o_ref):
    g1 = vec_ref[:, _OFF_G1:_OFF_G1 + F1]
    be1 = vec_ref[:, _OFF_B1:_OFF_B1 + F1]
    g2 = vec_ref[:, _OFF_G2:_OFF_G2 + F2]
    be2 = vec_ref[:, _OFF_B2:_OFF_B2 + F2]
    b3 = vec_ref[:, _OFF_B3:_OFF_B3 + F3]

    mmdt = w1_ref.dtype                # bf16 (perf) or f32 (exact) packing

    # fc1 (bias dropped: cancels under training-mode BN) -> BN -> ReLU
    h = jnp.dot(x_ref[...].astype(mmdt), w1_ref[...],
                preferred_element_type=jnp.float32)
    h = _bn_relu_fused(h, g1, be1)

    # fc2 (bias dropped) -> BN -> ReLU
    h = jnp.dot(h.astype(mmdt), w2_ref[...],
                preferred_element_type=jnp.float32)
    h = _bn_relu_fused(h, g2, be2)

    # fc3 (+ bias), kept in f32 -> ReLU.  Output width 128 is lane-dense.
    h = jnp.dot(h, w3_ref[...], preferred_element_type=jnp.float32) + b3
    o_ref[...] = jnp.maximum(h, 0.0)


def forward_fused(x, kernel_params):
    w1, w2, w3, vec = kernel_params
    B = x.shape[0]
    vmem = pl.BlockSpec(memory_space=pltpu.MemorySpace.VMEM)
    return pl.pallas_call(
        _fused_kernel,
        out_shape=jax.ShapeDtypeStruct((B, F3), jnp.float32),
        in_specs=[vmem] * 5,
        out_specs=vmem,
    )(x, w1, w2, w3, vec)


# ----------------------------------------------------------------------------
# Gridded path: batch-tiled, resident weights, two-phase BN statistics.
# ----------------------------------------------------------------------------
def _accum_stats_and_finalize(h, sum_ref, sumsq_ref, vec_ref, ss_ref,
                              batch, tb, g_off, b_off, width):
    i = pl.program_id(0)

    @pl.when(i == 0)
    def _():
        sum_ref[...] = jnp.zeros_like(sum_ref)
        sumsq_ref[...] = jnp.zeros_like(sumsq_ref)

    # Mask rows beyond the true batch (last tile may be padded).
    row = i * tb + jax.lax.broadcasted_iota(jnp.int32, (tb, 1), 0)
    hm = jnp.where(row < batch, h, 0.0)
    sum_ref[...] += jnp.sum(hm, axis=0, keepdims=True)
    sumsq_ref[...] += jnp.sum(hm * hm, axis=0, keepdims=True)

    @pl.when(i == pl.num_programs(0) - 1)
    def _():
        inv_b = 1.0 / batch
        mean = sum_ref[...] * inv_b
        var = sumsq_ref[...] * inv_b - mean * mean
        gamma = vec_ref[:, g_off:g_off + width]
        beta = vec_ref[:, b_off:b_off + width]
        scale = gamma * jax.lax.rsqrt(var + EPS)
        shift = beta - mean * scale
        ss_ref[0:1, :] = scale
        ss_ref[1:2, :] = shift


def _l1_kernel(x_ref, w_ref, vec_ref, h_ref, ss_ref, sum_ref, sumsq_ref,
               *, batch, tb):
    h = jnp.dot(x_ref[...].astype(w_ref.dtype), w_ref[...],
                preferred_element_type=jnp.float32)
    h_ref[...] = h
    _accum_stats_and_finalize(h, sum_ref, sumsq_ref, vec_ref, ss_ref,
                              batch, tb, _OFF_G1, _OFF_B1, F1)


def _l2_kernel(h1_ref, ss1_ref, w_ref, vec_ref, h_ref, ss_ref,
               sum_ref, sumsq_ref, *, batch, tb):
    a = jnp.maximum(h1_ref[...] * ss1_ref[0:1, :] + ss1_ref[1:2, :], 0.0)
    h = jnp.dot(a.astype(w_ref.dtype), w_ref[...],
                preferred_element_type=jnp.float32)
    h_ref[...] = h
    _accum_stats_and_finalize(h, sum_ref, sumsq_ref, vec_ref, ss_ref,
                              batch, tb, _OFF_G2, _OFF_B2, F2)


def _l3_kernel(h2_ref, ss2_ref, w_ref, vec_ref, o_ref):
    a = jnp.maximum(h2_ref[...] * ss2_ref[0:1, :] + ss2_ref[1:2, :], 0.0)
    b3 = vec_ref[:, _OFF_B3:_OFF_B3 + F3]
    h = jnp.dot(a, w_ref[...], preferred_element_type=jnp.float32) + b3
    o_ref[...] = jnp.maximum(h, 0.0)


def forward_gridded(x, kernel_params, *, tb=DEFAULT_TB):
    w1, w2, w3, vec = kernel_params
    B, D = x.shape
    tb = min(tb, B)
    nt = pl.cdiv(B, tb)

    resident = lambda i: (0, 0)
    batch_tile = lambda i: (i, 0)

    # --- layer 1: h1 = x @ w1, full-batch stats -> (scale1, shift1)
    h1, ss1 = pl.pallas_call(
        functools.partial(_l1_kernel, batch=B, tb=tb),
        grid_spec=pltpu.PrefetchScalarGridSpec(
            num_scalar_prefetch=0, grid=(nt,),
            in_specs=[pl.BlockSpec((tb, D), batch_tile),
                      pl.BlockSpec((D, F1), resident),
                      pl.BlockSpec((1, _VEC_W), resident)],
            out_specs=[pl.BlockSpec((tb, F1), batch_tile),
                       pl.BlockSpec((2, F1), resident)],
            scratch_shapes=[pltpu.VMEM((1, F1), jnp.float32),
                            pltpu.VMEM((1, F1), jnp.float32)]),
        out_shape=[jax.ShapeDtypeStruct((B, F1), jnp.float32),
                   jax.ShapeDtypeStruct((2, F1), jnp.float32)],
        compiler_params=pltpu.CompilerParams(
            dimension_semantics=("arbitrary",)),
    )(x, w1, vec)

    # --- layer 2: h2 = relu(bn1(h1)) @ w2, stats -> (scale2, shift2)
    h2, ss2 = pl.pallas_call(
        functools.partial(_l2_kernel, batch=B, tb=tb),
        grid_spec=pltpu.PrefetchScalarGridSpec(
            num_scalar_prefetch=0, grid=(nt,),
            in_specs=[pl.BlockSpec((tb, F1), batch_tile),
                      pl.BlockSpec((2, F1), resident),
                      pl.BlockSpec((F1, F2), resident),
                      pl.BlockSpec((1, _VEC_W), resident)],
            out_specs=[pl.BlockSpec((tb, F2), batch_tile),
                       pl.BlockSpec((2, F2), resident)],
            scratch_shapes=[pltpu.VMEM((1, F2), jnp.float32),
                            pltpu.VMEM((1, F2), jnp.float32)]),
        out_shape=[jax.ShapeDtypeStruct((B, F2), jnp.float32),
                   jax.ShapeDtypeStruct((2, F2), jnp.float32)],
        compiler_params=pltpu.CompilerParams(
            dimension_semantics=("arbitrary",)),
    )(h1, ss1, w2, vec)

    # --- layer 3: out = relu(relu(bn2(h2)) @ w3 + b3); fully parallel tiles.
    out = pl.pallas_call(
        _l3_kernel,
        grid_spec=pltpu.PrefetchScalarGridSpec(
            num_scalar_prefetch=0, grid=(nt,),
            in_specs=[pl.BlockSpec((tb, F2), batch_tile),
                      pl.BlockSpec((2, F2), resident),
                      pl.BlockSpec((F2, F3), resident),
                      pl.BlockSpec((1, _VEC_W), resident)],
            out_specs=pl.BlockSpec((tb, F3), batch_tile)),
        out_shape=jax.ShapeDtypeStruct((B, F3), jnp.float32),
        compiler_params=pltpu.CompilerParams(
            dimension_semantics=("parallel",)),
    )(h2, ss2, w3, vec)
    return out


def network_forward(x, kernel_params, *, tb=DEFAULT_TB):
    if x.shape[0] <= FUSED_MAX_BATCH:
        return forward_fused(x, kernel_params)
    return forward_gridded(x, kernel_params, tb=tb)


# ----------------------------------------------------------------------------
# Parameter handling / pure-JAX reference.
# ----------------------------------------------------------------------------
def pack_kernel_params(params, matmul_dtype=jnp.bfloat16):
    """One-time repack: drop the dead pre-BN biases, cast fc1/fc2 weights to
    the matmul dtype (fc3 stays f32), pack small per-feature vectors into a
    single 128-lane-aligned slab."""
    w1, b1, g1, be1, w2, b2, g2, be2, w3, b3 = params
    del b1, b2  # cancel exactly under training-mode batch statistics
    vec = jnp.concatenate([g1, be1, g2, be2, b3], axis=1)      # (1, 1664)
    return (w1.astype(matmul_dtype), w2.astype(matmul_dtype),
            w3.astype(jnp.float32), vec.astype(jnp.float32))


def init_params(key, input_dim):
    """Deterministic init mimicking torch.nn.Linear (uniform +-1/sqrt(fan_in))
    and torch.nn.BatchNorm1d (gamma=1, beta=0)."""
    dims = [input_dim, F1, F2, F3]
    params = []
    for i in range(3):
        fan_in, fan_out = dims[i], dims[i + 1]
        key, kw, kb = jax.random.split(key, 3)
        bound = 1.0 / (fan_in ** 0.5)
        w = jax.random.uniform(kw, (fan_in, fan_out), jnp.float32, -bound, bound)
        b = jax.random.uniform(kb, (1, fan_out), jnp.float32, -bound, bound)
        params.append(w)
        params.append(b)
        if i < 2:  # BatchNorm after fc1 / fc2 only
            params.append(jnp.ones((1, fan_out), jnp.float32))   # gamma
            params.append(jnp.zeros((1, fan_out), jnp.float32))  # beta
    return tuple(params)


def reference_forward(x, params):
    """Pure-JAX f32 reference, faithful to the PyTorch module."""
    w1, b1, g1, be1, w2, b2, g2, be2, w3, b3 = params

    def bn_relu(h, gamma, beta):
        mean = jnp.mean(h, axis=0, keepdims=True)
        var = jnp.mean((h - mean) ** 2, axis=0, keepdims=True)
        h = (h - mean) * jax.lax.rsqrt(var + EPS) * gamma + beta
        return jnp.maximum(h, 0.0)

    h = bn_relu(x @ w1 + b1, g1, be1)
    h = bn_relu(h @ w2 + b2, g2, be2)
    return jnp.maximum(h @ w3 + b3, 0.0)


if __name__ == "__main__":
    input_dim = 32

    key = jax.random.PRNGKey(0)
    key, kx1, kx2 = jax.random.split(key, 3)
    params = init_params(key, input_dim)

    kp_f32 = pack_kernel_params(params, matmul_dtype=jnp.float32)   # exact
    kp_bf16 = pack_kernel_params(params, matmul_dtype=jnp.bfloat16)  # perf

    # --- small batch: fused gridless path ---------------------------------
    x_small = jax.random.normal(kx1, (8, input_dim), jnp.float32)
    ref_small = jax.block_until_ready(reference_forward(x_small, params))

    out = jax.block_until_ready(forward_fused(x_small, kp_f32))
    assert out.shape == (8, F3)
    assert jnp.allclose(out, ref_small, atol=1e-4, rtol=1e-4), \
        "fused f32 mismatch vs reference"

    out = jax.block_until_ready(forward_fused(x_small, kp_bf16))
    assert jnp.allclose(out, ref_small, atol=5e-2, rtol=5e-2), \
        "fused bf16 mismatch vs reference"

    # --- gridded two-phase-BN path (tiny TB to exercise multi-tile stats) --
    x_grid = jax.random.normal(kx2, (24, input_dim), jnp.float32)
    ref_grid = jax.block_until_ready(reference_forward(x_grid, params))

    out = jax.block_until_ready(forward_gridded(x_grid, kp_f32, tb=8))
    assert out.shape == (24, F3)
    assert jnp.allclose(out, ref_grid, atol=1e-4, rtol=1e-4), \
        "gridded f32 mismatch vs reference"

    out = jax.block_until_ready(forward_gridded(x_grid, kp_bf16, tb=8))
    assert jnp.allclose(out, ref_grid, atol=5e-2, rtol=5e-2), \
        "gridded bf16 mismatch vs reference"

    print("KERNEL_OK")
</pallas_src>

<mosaic_0001>
module attributes {stable_mosaic.version = 11 : i64} {
  func.func @_fused_kernel(%arg0: memref<8x32xf32, #tpu.memory_space<vmem>>, %arg1: memref<32x512xf32, #tpu.memory_space<vmem>>, %arg2: memref<512x256xf32, #tpu.memory_space<vmem>>, %arg3: memref<256x128xf32, #tpu.memory_space<vmem>>, %arg4: memref<1x1664xf32, #tpu.memory_space<vmem>>, %arg5: memref<8x128xf32, #tpu.memory_space<vmem>>) attributes {dimension_semantics = [], scalar_prefetch = 0 : i64, scratch_operands = 0 : i64, tpu.core_type = #tpu.core_type<tc>} {
    %c0 = arith.constant 0 : index
    %c0_0 = arith.constant 0 : index
    %0 = vector.load %arg4[%c0, %c0_0] : memref<1x1664xf32, #tpu.memory_space<vmem>>, vector<1x512xf32>
    %c0_1 = arith.constant 0 : index
    %c512 = arith.constant 512 : index
    %1 = vector.load %arg4[%c0_1, %c512] : memref<1x1664xf32, #tpu.memory_space<vmem>>, vector<1x512xf32>
    %c0_2 = arith.constant 0 : index
    %c1024 = arith.constant 1024 : index
    %2 = vector.load %arg4[%c0_2, %c1024] : memref<1x1664xf32, #tpu.memory_space<vmem>>, vector<1x256xf32>
    %c0_3 = arith.constant 0 : index
    %c1280 = arith.constant 1280 : index
    %3 = vector.load %arg4[%c0_3, %c1280] : memref<1x1664xf32, #tpu.memory_space<vmem>>, vector<1x256xf32>
    %c0_4 = arith.constant 0 : index
    %c1536 = arith.constant 1536 : index
    %4 = vector.load %arg4[%c0_4, %c1536] : memref<1x1664xf32, #tpu.memory_space<vmem>>, vector<1x128xf32>
    %c0_5 = arith.constant 0 : index
    %c0_6 = arith.constant 0 : index
    %5 = vector.load %arg0[%c0_5, %c0_6] : memref<8x32xf32, #tpu.memory_space<vmem>>, vector<8x32xf32>
    %c0_7 = arith.constant 0 : index
    %c0_8 = arith.constant 0 : index
    %6 = vector.load %arg1[%c0_7, %c0_8] : memref<32x512xf32, #tpu.memory_space<vmem>>, vector<32x512xf32>
    %cst = arith.constant dense<0.000000e+00> : vector<8x512xf32>
    %7 = tpu.matmul %5, %6, %cst {dimension_numbers = #tpu.dot_dimension_numbers<[1], [0], [0], [1], [0, 0, 1, 1], [], []>} : vector<8x32xf32>, vector<32x512xf32>, vector<8x512xf32> -> vector<8x512xf32>
    %cst_9 = arith.constant dense<0.000000e+00> : vector<512xf32>
    %8 = vector.multi_reduction <add>, %7, %cst_9 [0] : vector<8x512xf32> to vector<512xf32>
    %9 = vector.shape_cast %8 : vector<512xf32> to vector<1x512xf32>
    %cst_10 = arith.constant 8.000000e+00 : f32
    %10 = vector.broadcast %cst_10 : f32 to vector<1x512xf32>
    %11 = arith.divf %9, %10 : vector<1x512xf32>
    %12 = arith.mulf %7, %7 : vector<8x512xf32>
    %cst_11 = arith.constant dense<0.000000e+00> : vector<512xf32>
    %13 = vector.multi_reduction <add>, %12, %cst_11 [0] : vector<8x512xf32> to vector<512xf32>
    %14 = vector.shape_cast %13 : vector<512xf32> to vector<1x512xf32>
    %cst_12 = arith.constant 8.000000e+00 : f32
    %15 = vector.broadcast %cst_12 : f32 to vector<1x512xf32>
    %16 = arith.divf %14, %15 : vector<1x512xf32>
    %17 = arith.mulf %11, %11 : vector<1x512xf32>
    %18 = arith.subf %16, %17 : vector<1x512xf32>
    %cst_13 = arith.constant 9.99999974E-6 : f32
    %19 = vector.broadcast %cst_13 : f32 to vector<1x512xf32>
    %20 = arith.addf %18, %19 : vector<1x512xf32>
    %21 = math.rsqrt %20 : vector<1x512xf32>
    %22 = arith.mulf %0, %21 : vector<1x512xf32>
    %23 = arith.mulf %11, %22 : vector<1x512xf32>
    %24 = arith.subf %1, %23 : vector<1x512xf32>
    %25 = vector.broadcast %22 : vector<1x512xf32> to vector<8x512xf32>
    %26 = arith.mulf %7, %25 : vector<8x512xf32>
    %27 = vector.broadcast %24 : vector<1x512xf32> to vector<8x512xf32>
    %28 = arith.addf %26, %27 : vector<8x512xf32>
    %cst_14 = arith.constant 0.000000e+00 : f32
    %29 = vector.broadcast %cst_14 : f32 to vector<8x512xf32>
    %30 = arith.maximumf %28, %29 : vector<8x512xf32>
    %c0_15 = arith.constant 0 : index
    %c0_16 = arith.constant 0 : index
    %31 = vector.load %arg2[%c0_15, %c0_16] : memref<512x256xf32, #tpu.memory_space<vmem>>, vector<512x256xf32>
    %cst_17 = arith.constant dense<0.000000e+00> : vector<8x256xf32>
    %32 = tpu.matmul %30, %31, %cst_17 {dimension_numbers = #tpu.dot_dimension_numbers<[1], [0], [0], [1], [0, 0, 1, 1], [], []>} : vector<8x512xf32>, vector<512x256xf32>, vector<8x256xf32> -> vector<8x256xf32>
    %cst_18 = arith.constant dense<0.000000e+00> : vector<256xf32>
    %33 = vector.multi_reduction <add>, %32, %cst_18 [0] : vector<8x256xf32> to vector<256xf32>
    %34 = vector.shape_cast %33 : vector<256xf32> to vector<1x256xf32>
    %cst_19 = arith.constant 8.000000e+00 : f32
    %35 = vector.broadcast %cst_19 : f32 to vector<1x256xf32>
    %36 = arith.divf %34, %35 : vector<1x256xf32>
    %37 = arith.mulf %32, %32 : vector<8x256xf32>
    %cst_20 = arith.constant dense<0.000000e+00> : vector<256xf32>
    %38 = vector.multi_reduction <add>, %37, %cst_20 [0] : vector<8x256xf32> to vector<256xf32>
    %39 = vector.shape_cast %38 : vector<256xf32> to vector<1x256xf32>
    %cst_21 = arith.constant 8.000000e+00 : f32
    %40 = vector.broadcast %cst_21 : f32 to vector<1x256xf32>
    %41 = arith.divf %39, %40 : vector<1x256xf32>
    %42 = arith.mulf %36, %36 : vector<1x256xf32>
    %43 = arith.subf %41, %42 : vector<1x256xf32>
    %cst_22 = arith.constant 9.99999974E-6 : f32
    %44 = vector.broadcast %cst_22 : f32 to vector<1x256xf32>
    %45 = arith.addf %43, %44 : vector<1x256xf32>
    %46 = math.rsqrt %45 : vector<1x256xf32>
    %47 = arith.mulf %2, %46 : vector<1x256xf32>
    %48 = arith.mulf %36, %47 : vector<1x256xf32>
    %49 = arith.subf %3, %48 : vector<1x256xf32>
    %50 = vector.broadcast %47 : vector<1x256xf32> to vector<8x256xf32>
    %51 = arith.mulf %32, %50 : vector<8x256xf32>
    %52 = vector.broadcast %49 : vector<1x256xf32> to vector<8x256xf32>
    %53 = arith.addf %51, %52 : vector<8x256xf32>
    %cst_23 = arith.constant 0.000000e+00 : f32
    %54 = vector.broadcast %cst_23 : f32 to vector<8x256xf32>
    %55 = arith.maximumf %53, %54 : vector<8x256xf32>
    %c0_24 = arith.constant 0 : index
    %c0_25 = arith.constant 0 : index
    %56 = vector.load %arg3[%c0_24, %c0_25] : memref<256x128xf32, #tpu.memory_space<vmem>>, vector<256x128xf32>
    %cst_26 = arith.constant dense<0.000000e+00> : vector<8x128xf32>
    %57 = tpu.matmul %55, %56, %cst_26 {dimension_numbers = #tpu.dot_dimension_numbers<[1], [0], [0], [1], [0, 0, 1, 1], [], []>} : vector<8x256xf32>, vector<256x128xf32>, vector<8x128xf32> -> vector<8x128xf32>
    %58 = vector.broadcast %4 : vector<1x128xf32> to vector<8x128xf32>
    %59 = arith.addf %57, %58 : vector<8x128xf32>
    %cst_27 = arith.constant 0.000000e+00 : f32
    %60 = vector.broadcast %cst_27 : f32 to vector<8x128xf32>
    %61 = arith.maximumf %59, %60 : vector<8x128xf32>
    %c0_28 = arith.constant 0 : index
    %c0_29 = arith.constant 0 : index
    %62 = vector.load %arg5[%c0_28, %c0_29] : memref<8x128xf32, #tpu.memory_space<vmem>>, vector<8x128xf32>
    tpu.vector_store %arg5[%c0_28, %c0_29], %61 {strides = array<i32>} : memref<8x128xf32, #tpu.memory_space<vmem>>, vector<8x128xf32>,
    return
  }
}

</mosaic_0001>

<llo_original>
// kernel: tpu_custom_call.1
$region0: #{tpu_custom_call.1}
  #allocation0 [shape = 'u32[]', space=smem, size = 0x4, offset = 0x4, fixed_abs, tag = 'smem constant byte address 0x4 - core index']
  #allocation1 [shape = 'u32[144,128]{1,0:T(1,128)}', space=vmem, size = 0x12000, scoped, tag = 'internal scratch']
  %s0 = inlined_call_operand.hbm [shape: f32[8,32], index: 0, kind: input, shape index: {}]
  %s1 = inlined_call_operand.hbm [shape: f32[32,512], index: 1, kind: input, shape index: {}]
  %s2 = inlined_call_operand.hbm [shape: f32[512,256], index: 2, kind: input, shape index: {}]
  %s3 = inlined_call_operand.hbm [shape: f32[256,128], index: 3, kind: input, shape index: {}]
  %s4 = inlined_call_operand.hbm [shape: f32[1,1664], index: 4, kind: input, shape index: {}]
  %s5 = inlined_call_operand.hbm [shape: f32[8,128], index: 5, kind: output, shape index: {}]
  %s6 = sld [smem:[#allocation0]]
  $region50: #{tpu_custom_call.1} parent=0
    _
  %s8 = ssub.s32 1, %s6
  %s9 = scalar_select 0, %s8, %s6
  $region1: #{tpu_custom_call.1} parent=0
    #allocation2 [shape = 'u8[4096]{0}', space=vmem, size = 0x1000, scoped, tag = 'input window, operand 0, single buffered']
    #allocation3 [shape = 's32[1]{0}', space=sflag, size = 0x4, scoped, tag = 'scoped memory for tpu_custom_call.1']
    #allocation4 [shape = 's32[1]{0}', space=sflag, size = 0x4, scoped, tag = 'scoped memory for tpu_custom_call.1']
    #allocation5 [shape = 'u8[65536]{0}', space=vmem, size = 0x10000, scoped, tag = 'input window, operand 1, single buffered']
    #allocation6 [shape = 's32[1]{0}', space=sflag, size = 0x4, scoped, tag = 'scoped memory for tpu_custom_call.1']
    #allocation7 [shape = 'u8[524288]{0}', space=vmem, size = 0x80000, scoped, tag = 'input window, operand 2, single buffered']
    #allocation8 [shape = 'u8[131072]{0}', space=vmem, size = 0x20000, scoped, tag = 'input window, operand 3, single buffered']
    #allocation9 [shape = 's32[1]{0}', space=sflag, size = 0x4, scoped, tag = 'scoped memory for tpu_custom_call.1']
    #allocation10 [shape = 'u8[6656]{0}', space=vmem, size = 0x1c00, scoped, tag = 'input window, operand 4, single buffered']
    #allocation11 [shape = 'u8[4096]{0}', space=vmem, size = 0x1000, scoped, tag = 'output window, operand 0, single buffered']
    %10 = vsyncpa [#allocation3], 0
    %11 = vsyncpa [#allocation6], 0
    %12 = vsyncpa [#allocation9], 0
    %13 = vsyncpa [#allocation4], 0
    // Predicated region
    $region2: #{tpu_custom_call.1} parent=1 // pred_check
      _
    $region3: #{tpu_custom_call.1} parent=1 // pred_check_branch
      %15 = sbr.rel (0) target = $region5
    $region4: #{tpu_custom_call.1} parent=1 // pred_region
      %s17 = ssub.s32 128, 128
      %18 = vsyncadd [#allocation3], %s17
      %s20 = sshll.u32 [#allocation2], 4
      %s21 = int_to_ptr.vmem [resolvable:$true] %s20
      %23 = dma.hbm_to_vmem [thread:$0]  %s0, 128, %s21, [#allocation3]
    $region5: #{tpu_custom_call.1} parent=1 // pred_fallthru
      _
    // Predicated region
    $region6: #{tpu_custom_call.1} parent=1 // pred_check
      _
    $region7: #{tpu_custom_call.1} parent=1 // pred_check_branch
      %25 = sbr.rel (0) target = $region9
    $region8: #{tpu_custom_call.1} parent=1 // pred_region
      %s27 = ssub.s32 2048, 2048
      %28 = vsyncadd [#allocation6], %s27
      %s29 = sshll.u32 [#allocation5], 4
      %s30 = int_to_ptr.vmem [resolvable:$true] %s29
      %35 = dma.hbm_to_vmem [thread:$0]  %s1, 2048, %s30, [#allocation6], 512, 512, 32
    $region9: #{tpu_custom_call.1} parent=1 // pred_fallthru
      _
    // Predicated region
    $region10: #{tpu_custom_call.1} parent=1 // pred_check
      _
    $region11: #{tpu_custom_call.1} parent=1 // pred_check_branch
      %37 = sbr.rel (0) target = $region13
    $region12: #{tpu_custom_call.1} parent=1 // pred_region
      %s39 = ssub.s32 16384, 16384
      %40 = vsyncadd [#allocation6], %s39
      %s41 = sshll.u32 [#allocation7], 4
      %s42 = int_to_ptr.vmem [resolvable:$true] %s41
      %47 = dma.hbm_to_vmem [thread:$0]  %s2, 16384, %s42, [#allocation6], 256, 256, 16
    $region13: #{tpu_custom_call.1} parent=1 // pred_fallthru
      _
    // Predicated region
    $region14: #{tpu_custom_call.1} parent=1 // pred_check
      _
    $region15: #{tpu_custom_call.1} parent=1 // pred_check_branch
      %49 = sbr.rel (0) target = $region17
    $region16: #{tpu_custom_call.1} parent=1 // pred_region
      %s51 = ssub.s32 4096, 4096
      %52 = vsyncadd [#allocation9], %s51
      %s53 = sshll.u32 [#allocation8], 4
      %s54 = int_to_ptr.vmem [resolvable:$true] %s53
      %59 = dma.hbm_to_vmem [thread:$0]  %s3, 4096, %s54, [#allocation9], 128, 128, 8
    $region17: #{tpu_custom_call.1} parent=1 // pred_fallthru
      _
    // Predicated region
    $region18: #{tpu_custom_call.1} parent=1 // pred_check
      _
    $region19: #{tpu_custom_call.1} parent=1 // pred_check_branch
      %61 = sbr.rel (0) target = $region21
    $region20: #{tpu_custom_call.1} parent=1 // pred_region
      %s63 = ssub.s32 208, 208
      %64 = vsyncadd [#allocation9], %s63
      %s66 = sshll.u32 [#allocation10], 4
      %s67 = int_to_ptr.vmem [resolvable:$true] %s66
      %69 = dma.hbm_to_vmem [thread:$0]  %s4, 208, %s67, [#allocation9]
    $region21: #{tpu_custom_call.1} parent=1 // pred_fallthru
      _
    // Predicated region
    $region22: #{tpu_custom_call.1} parent=1 // pred_check
      _
    $region23: #{tpu_custom_call.1} parent=1 // pred_check_branch
      %71 = sbr.rel (0) target = $region25
    $region24: #{tpu_custom_call.1} parent=1 // pred_region
      %72 = dma.done [#allocation3], 128
    $region25: #{tpu_custom_call.1} parent=1 // pred_fallthru
      _
    // Predicated region
    $region26: #{tpu_custom_call.1} parent=1 // pred_check
      _
    $region27: #{tpu_custom_call.1} parent=1 // pred_check_branch
      %74 = sbr.rel (0) target = $region29
    $region28: #{tpu_custom_call.1} parent=1 // pred_region
      %75 = dma.done [#allocation6], 2048
    $region29: #{tpu_custom_call.1} parent=1 // pred_fallthru
      _
    // Predicated region
    $region30: #{tpu_custom_call.1} parent=1 // pred_check
      _
    $region31: #{tpu_custom_call.1} parent=1 // pred_check_branch
      %77 = sbr.rel (0) target = $region33
    $region32: #{tpu_custom_call.1} parent=1 // pred_region
      %78 = dma.done [#allocation6], 16384
    $region33: #{tpu_custom_call.1} parent=1 // pred_fallthru
      _
    // Predicated region
    $region34: #{tpu_custom_call.1} parent=1 // pred_check
      _
    $region35: #{tpu_custom_call.1} parent=1 // pred_check_branch
      %80 = sbr.rel (0) target = $region37
    $region36: #{tpu_custom_call.1} parent=1 // pred_region
      %81 = dma.done [#allocation9], 4096
    $region37: #{tpu_custom_call.1} parent=1 // pred_fallthru
      _
    // Predicated region
    $region38: #{tpu_custom_call.1} parent=1 // pred_check
      _
    $region39: #{tpu_custom_call.1} parent=1 // pred_check_branch
      %83 = sbr.rel (0) target = $region41
    $region40: #{tpu_custom_call.1} parent=1 // pred_region
      %84 = dma.done [#allocation9], 208
    $region41: #{tpu_custom_call.1} parent=1 // pred_fallthru
      _
    %v85 = vld [vmem:[#allocation10] sm:$0xf]
    %v86 = vld [vmem:[#allocation10 + $0x4] sm:$0xf]
    %v87 = vld [vmem:[#allocation10 + $0x8] sm:$0x3]
    %v88 = vld [vmem:[#allocation10 + $0xa] sm:$0x3]
    %v89 = vld [vmem:[#allocation10 + $0xc] sm:$0x1]
    %v90 = vld [vmem:[#allocation2] sm:$0xff]
    %v91 = vld [vmem:[#allocation5] sm:$0xff]
    %v92 = vld [vmem:[#allocation5 + $0x8] sm:$0xff]
    %v93 = vld [vmem:[#allocation5 + $0x10] sm:$0xff]
    %v94 = vld [vmem:[#allocation5 + $0x18] sm:$0xff]
    %v95 = vld [vmem:[#allocation5 + $0x20] sm:$0xff]
    %v96 = vld [vmem:[#allocation5 + $0x28] sm:$0xff]
    %v97 = vld [vmem:[#allocation5 + $0x30] sm:$0xff]
    %v98 = vld [vmem:[#allocation5 + $0x38] sm:$0xff]
    %v99 = vld [vmem:[#allocation5 + $0x40] sm:$0xff]
    %v100 = vld [vmem:[#allocation5 + $0x48] sm:$0xff]
    %v101 = vld [vmem:[#allocation5 + $0x50] sm:$0xff]
    %v102 = vld [vmem:[#allocation5 + $0x58] sm:$0xff]
    %v103 = vld [vmem:[#allocation5 + $0x60] sm:$0xff]
    %v104 = vld [vmem:[#allocation5 + $0x68] sm:$0xff]
    %v105 = vld [vmem:[#allocation5 + $0x70] sm:$0xff]
    %v106 = vld [vmem:[#allocation5 + $0x78] sm:$0xff]
    %vm107 = vcmask 261120
    %v109 = vsel %vm107, %v90, 0
    %111 = vmatprep.subr.mxu0 0.0
    %112 = vmatpush1.msra.mxu0 0.0
    %113 = vmatprep.subr.mxu0 0.0
    %114 = vmatpush1.msra.mxu0 0.0
    %115 = vmatprep.subr.mxu0 0.0
    %116 = vmatpush1.msra.mxu0 0.0
    %117 = vmatprep.subr.mxu0 0.0
    %118 = vmatpush1.msra.mxu0 0.0
    %119 = vmatprep.subr.mxu0 0.0
    %120 = vmatpush1.msra.mxu0 0.0
    %121 = vmatprep.subr.mxu0 0.0
    %122 = vmatpush1.msra.mxu0 0.0
    %123 = vmatprep.subr.mxu0 0.0
    %124 = vmatpush1.msra.mxu0 0.0
    %125 = vmatprep.subr.mxu0 0.0
    %126 = vmatpush1.msra.mxu0 0.0
    %127 = vmatprep.subr.mxu0 0.0
    %128 = vmatpush1.msra.mxu0 0.0
    %129 = vmatprep.subr.mxu0 0.0
    %130 = vmatpush1.msra.mxu0 0.0
    %131 = vmatprep.subr.mxu0 0.0
    %132 = vmatpush1.msra.mxu0 0.0
    %133 = vmatprep.subr.mxu0 0.0
    %134 = vmatpush1.msra.mxu0 0.0
    %135 = vmatprep.subr.mxu0 %v104
    %136 = vmatpush1.msra.mxu0 %v103
    %137 = vmatprep.subr.mxu0 %v100
    %138 = vmatpush1.msra.mxu0 %v99
    %139 = vmatprep.subr.mxu0 %v96
    %140 = vmatpush1.msra.mxu0 %v95
    %141 = vmatprep.subr.mxu0 %v92
    %142 = vmatpush1.msra.mxu0 %v91
    %143 = vmatprep.subr.mxu0 0.0
    %144 = vmatpush2.msra.mxu0 0.0
    %145 = vmatprep.subr.mxu0 0.0
    %146 = vmatpush2.msra.mxu0 0.0
    %147 = vmatprep.subr.mxu0 0.0
    %148 = vmatpush2.msra.mxu0 0.0
    %149 = vmatprep.subr.mxu0 0.0
    %150 = vmatpush2.msra.mxu0 0.0
    %151 = vmatprep.subr.mxu0 0.0
    %152 = vmatpush2.msra.mxu0 0.0
    %153 = vmatprep.subr.mxu0 0.0
    %154 = vmatpush2.msra.mxu0 0.0
    %155 = vmatprep.subr.mxu0 0.0
    %156 = vmatpush2.msra.mxu0 0.0
    %157 = vmatprep.subr.mxu0 0.0
    %158 = vmatpush2.msra.mxu0 0.0
    %159 = vmatprep.subr.mxu0 0.0
    %160 = vmatpush2.msra.mxu0 0.0
    %161 = vmatprep.subr.mxu0 0.0
    %162 = vmatpush2.msra.mxu0 0.0
    %163 = vmatprep.subr.mxu0 0.0
    %164 = vmatpush2.msra.mxu0 0.0
    %165 = vmatprep.subr.mxu0 0.0
    %166 = vmatpush2.msra.mxu0 0.0
    %167 = vmatprep.subr.mxu0 0.0
    %168 = vmatpush2.msra.mxu0 0.0
    %169 = vmatprep.subr.mxu0 0.0
    %170 = vmatpush2.msra.mxu0 0.0
    %171 = vmatprep.subr.mxu0 0.0
    %172 = vmatpush2.msra.mxu0 0.0
    %173 = vmatprep.subr.mxu0 0.0
    %174 = vmatpush2.msra.mxu0 0.0
    %175 = vmatprep.mubr.f32.mxu0 0.0
    %176 = vmatmul.mubr.f32.gmra.mxu0 %v109
    %v177 = vpop.f32.mrf.mxu0
    %v178 = vadd.f32 0.0, %v177
    %v179 = vpop.f32.mrf.mxu0
    %v180 = vadd.f32 0.0, %v179
    %181 = vdwg.mxu0
    %182 = vmatprep.subr.mxu0 0.0
    %183 = vmatpush1.msra.mxu0 0.0
    %184 = vmatprep.subr.mxu0 0.0
    %185 = vmatpush1.msra.mxu0 0.0
    %186 = vmatprep.subr.mxu0 0.0
    %187 = vmatpush1.msra.mxu0 0.0
    %188 = vmatprep.subr.mxu0 0.0
    %189 = vmatpush1.msra.mxu0 0.0
    %190 = vmatprep.subr.mxu0 0.0
    %191 = vmatpush1.msra.mxu0 0.0
    %192 = vmatprep.subr.mxu0 0.0
    %193 = vmatpush1.msra.mxu0 0.0
    %194 = vmatprep.subr.mxu0 0.0
    %195 = vmatpush1.msra.mxu0 0.0
    %196 = vmatprep.subr.mxu0 0.0
    %197 = vmatpush1.msra.mxu0 0.0
    %198 = vmatprep.subr.mxu0 0.0
    %199 = vmatpush1.msra.mxu0 0.0
    %200 = vmatprep.subr.mxu0 0.0
    %201 = vmatpush1.msra.mxu0 0.0
    %202 = vmatprep.subr.mxu0 0.0
    %203 = vmatpush1.msra.mxu0 0.0
    %204 = vmatprep.subr.mxu0 0.0
    %205 = vmatpush1.msra.mxu0 0.0
    %206 = vmatprep.subr.mxu0 %v106
    %207 = vmatpush1.msra.mxu0 %v105
    %208 = vmatprep.subr.mxu0 %v102
    %209 = vmatpush1.msra.mxu0 %v101
    %210 = vmatprep.subr.mxu0 %v98
    %211 = vmatpush1.msra.mxu0 %v97
    %212 = vmatprep.subr.mxu0 %v94
    %213 = vmatpush1.msra.mxu0 %v93
    %214 = vmatprep.subr.mxu0 0.0
    %215 = vmatpush2.msra.mxu0 0.0
    %216 = vmatprep.subr.mxu0 0.0
    %217 = vmatpush2.msra.mxu0 0.0
    %218 = vmatprep.subr.mxu0 0.0
    %219 = vmatpush2.msra.mxu0 0.0
    %220 = vmatprep.subr.mxu0 0.0
    %221 = vmatpush2.msra.mxu0 0.0
    %222 = vmatprep.subr.mxu0 0.0
    %223 = vmatpush2.msra.mxu0 0.0
    %224 = vmatprep.subr.mxu0 0.0
    %225 = vmatpush2.msra.mxu0 0.0
    %226 = vmatprep.subr.mxu0 0.0
    %227 = vmatpush2.msra.mxu0 0.0
    %228 = vmatprep.subr.mxu0 0.0
    %229 = vmatpush2.msra.mxu0 0.0
    %230 = vmatprep.subr.mxu0 0.0
    %231 = vmatpush2.msra.mxu0 0.0
    %232 = vmatprep.subr.mxu0 0.0
    %233 = vmatpush2.msra.mxu0 0.0
    %234 = vmatprep.subr.mxu0 0.0
    %235 = vmatpush2.msra.mxu0 0.0
    %236 = vmatprep.subr.mxu0 0.0
    %237 = vmatpush2.msra.mxu0 0.0
    %238 = vmatprep.subr.mxu0 0.0
    %239 = vmatpush2.msra.mxu0 0.0
    %240 = vmatprep.subr.mxu0 0.0
    %241 = vmatpush2.msra.mxu0 0.0
    %242 = vmatprep.subr.mxu0 0.0
    %243 = vmatpush2.msra.mxu0 0.0
    %244 = vmatprep.subr.mxu0 0.0
    %245 = vmatpush2.msra.mxu0 0.0
    %246 = vmatprep.mubr.f32.mxu0 0.0
    %247 = vmatmul.mubr.f32.gmra.mxu0 %v109
    %v248 = vpop.f32.mrf.mxu0
    %v249 = vadd.f32 0.0, %v248
    %v250 = vpop.f32.mrf.mxu0
    %v251 = vadd.f32 0.0, %v250
    %252 = vdwg.mxu0
    %v253 = vrot.slane %v178, 4
    %v254 = vadd.f32 %v178, %v253
    %v255 = vrot.slane %v254, 2
    %v256 = vadd.f32 %v254, %v255
    %v257 = vrot.slane %v256, 1
    %v258 = vadd.f32 %v256, %v257
    %v259 = vrot.slane %v180, 4
    %v260 = vadd.f32 %v180, %v259
    %v261 = vrot.slane %v260, 2
    %v262 = vadd.f32 %v260, %v261
    %v263 = vrot.slane %v262, 1
    %v264 = vadd.f32 %v262, %v263
    %v265 = vrot.slane %v249, 4
    %v266 = vadd.f32 %v249, %v265
    %v267 = vrot.slane %v266, 2
    %v268 = vadd.f32 %v266, %v267
    %v269 = vrot.slane %v268, 1
    %v270 = vadd.f32 %v268, %v269
    %v271 = vrot.slane %v251, 4
    %v272 = vadd.f32 %v251, %v271
    %v273 = vrot.slane %v272, 2
    %v274 = vadd.f32 %v272, %v273
    %v275 = vrot.slane %v274, 1
    %v276 = vadd.f32 %v274, %v275
    %v277 = vrcp.pop 8.0
    %v278 = vmul.f32 %v258, %v277
    %v279 = vmul.f32 %v264, %v277
    %v280 = vmul.f32 %v270, %v277
    %v281 = vmul.f32 %v276, %v277
    %v282 = vmul.f32 %v178, %v178
    %v283 = vmul.f32 %v180, %v180
    %v284 = vmul.f32 %v249, %v249
    %v285 = vmul.f32 %v251, %v251
    %v286 = vrot.slane %v282, 4
    %v287 = vadd.f32 %v282, %v286
    %v288 = vrot.slane %v287, 2
    %v289 = vadd.f32 %v287, %v288
    %v290 = vrot.slane %v289, 1
    %v291 = vadd.f32 %v289, %v290
    %v292 = vrot.slane %v283, 4
    %v293 = vadd.f32 %v283, %v292
    %v294 = vrot.slane %v293, 2
    %v295 = vadd.f32 %v293, %v294
    %v296 = vrot.slane %v295, 1
    %v297 = vadd.f32 %v295, %v296
    %v298 = vrot.slane %v284, 4
    %v299 = vadd.f32 %v284, %v298
    %v300 = vrot.slane %v299, 2
    %v301 = vadd.f32 %v299, %v300
    %v302 = vrot.slane %v301, 1
    %v303 = vadd.f32 %v301, %v302
    %v304 = vrot.slane %v285, 4
    %v305 = vadd.f32 %v285, %v304
    %v306 = vrot.slane %v305, 2
    %v307 = vadd.f32 %v305, %v306
    %v308 = vrot.slane %v307, 1
    %v309 = vadd.f32 %v307, %v308
    %v310 = vmul.f32 %v291, %v277
    %v311 = vmul.f32 %v297, %v277
    %v312 = vmul.f32 %v303, %v277
    %v313 = vmul.f32 %v309, %v277
    %v314 = vmul.f32 %v278, %v278
    %v315 = vmul.f32 %v279, %v279
    %v316 = vmul.f32 %v280, %v280
    %v317 = vmul.f32 %v281, %v281
    %v318 = vsub.f32 %v310, %v314
    %v319 = vsub.f32 %v311, %v315
    %v320 = vsub.f32 %v312, %v316
    %v321 = vsub.f32 %v313, %v317
    %v322 = vadd.f32 %v318, 1e-05
    %v323 = vadd.f32 %v319, 1e-05
    %v324 = vadd.f32 %v320, 1e-05
    %v325 = vadd.f32 %v321, 1e-05
    %v326 = vrsqrt.pop %v322
    %v327 = vrsqrt.pop %v323
    %v328 = vrsqrt.pop %v324
    %v329 = vrsqrt.pop %v325
    %v334 = vcombine.low %v326, %v327
    %v335 = vcombine.low %v328, %v329
    %v337 = vunpack.c.l.s4 1966171168
    %v338 = vunpack.c.0.s8 %v337
    %v339 = vlaneseq
    %v340 = vshrl.u32 %v339, 7
    %v341 = vsub.s32 %v338, %v340
    %v342 = vrot.slane %v334, %v341
    %v344 = vunpack.c.l.s4 1966171168
    %v345 = vunpack.c.0.s8 %v344
    %v346 = vlaneseq
    %v347 = vshrl.u32 %v346, 7
    %v348 = vsub.s32 %v345, %v347
    %v349 = vrot.slane %v335, %v348
    %v350 = vcombine.low %v342, %v349
    %v352 = vunpack.c.l.s4 1966171168
    %v353 = vunpack.c.0.s8 %v352
    %v354 = vlaneseq
    %v355 = vshrl.u32 %v354, 7
    %v356 = vsub.s32 %v353, %v355
    %v357 = vrot.slane %v350, %v356
    %v359 = vmul.f32 %v85, %v357
    %v361 = vlaneseq
    %v362 = vshrl.u32 %v361, 7
    %v363 = vsub.s32 0, %v362
    %v364 = vrot.slane %v359, %v363
    %v365 = vlaneseq
    %v366 = vshrl.u32 %v365, 7
    %v367 = vsub.s32 1, %v366
    %v368 = vrot.slane %v359, %v367
    %v369 = vlaneseq
    %v370 = vshrl.u32 %v369, 7
    %v371 = vsub.s32 2, %v370
    %v372 = vrot.slane %v359, %v371
    %v373 = vlaneseq
    %v374 = vshrl.u32 %v373, 7
    %v375 = vsub.s32 3, %v374
    %v376 = vrot.slane %v359, %v375
    %v381 = vmul.f32 %v278, %v364
    %v382 = vmul.f32 %v279, %v368
    %v383 = vmul.f32 %v280, %v372
    %v384 = vmul.f32 %v281, %v376
    %v389 = vcombine.low %v381, %v382
    %v390 = vcombine.low %v383, %v384
    %v392 = vunpack.c.l.s4 1966171168
    %v393 = vunpack.c.0.s8 %v392
    %v394 = vlaneseq
    %v395 = vshrl.u32 %v394, 7
    %v396 = vsub.s32 %v393, %v395
    %v397 = vrot.slane %v389, %v396
    %v399 = vunpack.c.l.s4 1966171168
    %v400 = vunpack.c.0.s8 %v399
    %v401 = vlaneseq
    %v402 = vshrl.u32 %v401, 7
    %v403 = vsub.s32 %v400, %v402
    %v404 = vrot.slane %v390, %v403
    %v405 = vcombine.low %v397, %v404
    %v407 = vunpack.c.l.s4 1966171168
    %v408 = vunpack.c.0.s8 %v407
    %v409 = vlaneseq
    %v410 = vshrl.u32 %v409, 7
    %v411 = vsub.s32 %v408, %v410
    %v412 = vrot.slane %v405, %v411
    %v414 = vsub.f32 %v86, %v412
    %v415 = vmul.f32 %v178, %v364
    %v416 = vmul.f32 %v180, %v368
    %v417 = vmul.f32 %v249, %v372
    %v418 = vmul.f32 %v251, %v376
    %v420 = vlaneseq
    %v421 = vshrl.u32 %v420, 7
    %v422 = vsub.s32 0, %v421
    %v423 = vrot.slane %v414, %v422
    %v424 = vlaneseq
    %v425 = vshrl.u32 %v424, 7
    %v426 = vsub.s32 1, %v425
    %v427 = vrot.slane %v414, %v426
    %v428 = vlaneseq
    %v429 = vshrl.u32 %v428, 7
    %v430 = vsub.s32 2, %v429
    %v431 = vrot.slane %v414, %v430
    %v432 = vlaneseq
    %v433 = vshrl.u32 %v432, 7
    %v434 = vsub.s32 3, %v433
    %v435 = vrot.slane %v414, %v434
    %v440 = vadd.f32 %v415, %v423
    %v441 = vadd.f32 %v416, %v427
    %v442 = vadd.f32 %v417, %v431
    %v443 = vadd.f32 %v418, %v435
    %v444 = vmax.f32 %v440, 0.0
    %v445 = vmax.f32 %v441, 0.0
    %v446 = vmax.f32 %v442, 0.0
    %v447 = vmax.f32 %v443, 0.0
    %v448 = vld [vmem:[#allocation7] sm:$0xff]
    %v449 = vld [vmem:[#allocation7 + $0x8] sm:$0xff]
    %v450 = vld [vmem:[#allocation7 + $0x10] sm:$0xff]
    %v451 = vld [vmem:[#allocation7 + $0x18] sm:$0xff]
    %v452 = vld [vmem:[#allocation7 + $0x20] sm:$0xff]
    %v453 = vld [vmem:[#allocation7 + $0x28] sm:$0xff]
    %v454 = vld [vmem:[#allocation7 + $0x30] sm:$0xff]
    %v455 = vld [vmem:[#allocation7 + $0x38] sm:$0xff]
    %v456 = vld [vmem:[#allocation7 + $0x40] sm:$0xff]
    %v457 = vld [vmem:[#allocation7 + $0x48] sm:$0xff]
    %v458 = vld [vmem:[#allocation7 + $0x50] sm:$0xff]
    %v459 = vld [vmem:[#allocation7 + $0x58] sm:$0xff]
    %v460 = vld [vmem:[#allocation7 + $0x60] sm:$0xff]
    %v461 = vld [vmem:[#allocation7 + $0x68] sm:$0xff]
    %v462 = vld [vmem:[#allocation7 + $0x70] sm:$0xff]
    %v463 = vld [vmem:[#allocation7 + $0x78] sm:$0xff]
    %v464 = vld [vmem:[#allocation7 + $0x80] sm:$0xff]
    %v465 = vld [vmem:[#allocation7 + $0x88] sm:$0xff]
    %v466 = vld [vmem:[#allocation7 + $0x90] sm:$0xff]
    %v467 = vld [vmem:[#allocation7 + $0x98] sm:$0xff]
    %v468 = vld [vmem:[#allocation7 + $0xa0] sm:$0xff]
    %v469 = vld [vmem:[#allocation7 + $0xa8] sm:$0xff]
    %v470 = vld [vmem:[#allocation7 + $0xb0] sm:$0xff]
    %v471 = vld [vmem:[#allocation7 + $0xb8] sm:$0xff]
    %v472 = vld [vmem:[#allocation7 + $0xc0] sm:$0xff]
    %v473 = vld [vmem:[#allocation7 + $0xc8] sm:$0xff]
    %v474 = vld [vmem:[#allocation7 + $0xd0] sm:$0xff]
    %v475 = vld [vmem:[#allocation7 + $0xd8] sm:$0xff]
    %v476 = vld [vmem:[#allocation7 + $0xe0] sm:$0xff]
    %v477 = vld [vmem:[#allocation7 + $0xe8] sm:$0xff]
    %v478 = vld [vmem:[#allocation7 + $0xf0] sm:$0xff]
    %v479 = vld [vmem:[#allocation7 + $0xf8] sm:$0xff]
    %v480 = vld [vmem:[#allocation7 + $0x100] sm:$0xff]
    %v481 = vld [vmem:[#allocation7 + $0x108] sm:$0xff]
    %v482 = vld [vmem:[#allocation7 + $0x110] sm:$0xff]
    %v483 = vld [vmem:[#allocation7 + $0x118] sm:$0xff]
    %v484 = vld [vmem:[#allocation7 + $0x120] sm:$0xff]
    %v485 = vld [vmem:[#allocation7 + $0x128] sm:$0xff]
    %v486 = vld [vmem:[#allocation7 + $0x130] sm:$0xff]
    %v487 = vld [vmem:[#allocation7 + $0x138] sm:$0xff]
    %v488 = vld [vmem:[#allocation7 + $0x140] sm:$0xff]
    %v489 = vld [vmem:[#allocation7 + $0x148] sm:$0xff]
    %v490 = vld [vmem:[#allocation7 + $0x150] sm:$0xff]
    %v491 = vld [vmem:[#allocation7 + $0x158] sm:$0xff]
    %v492 = vld [vmem:[#allocation7 + $0x160] sm:$0xff]
    %v493 = vld [vmem:[#allocation7 + $0x168] sm:$0xff]
    %v494 = vld [vmem:[#allocation7 + $0x170] sm:$0xff]
    %v495 = vld [vmem:[#allocation7 + $0x178] sm:$0xff]
    %v496 = vld [vmem:[#allocation7 + $0x180] sm:$0xff]
    %v497 = vld [vmem:[#allocation7 + $0x188] sm:$0xff]
    %v498 = vld [vmem:[#allocation7 + $0x190] sm:$0xff]
    %v499 = vld [vmem:[#allocation7 + $0x198] sm:$0xff]
    %v500 = vld [vmem:[#allocation7 + $0x1a0] sm:$0xff]
    %v501 = vld [vmem:[#allocation7 + $0x1a8] sm:$0xff]
    %v502 = vld [vmem:[#allocation7 + $0x1b0] sm:$0xff]
    %v503 = vld [vmem:[#allocation7 + $0x1b8] sm:$0xff]
    %v504 = vld [vmem:[#allocation7 + $0x1c0] sm:$0xff]
    %v505 = vld [vmem:[#allocation7 + $0x1c8] sm:$0xff]
    %v506 = vld [vmem:[#allocation7 + $0x1d0] sm:$0xff]
    %v507 = vld [vmem:[#allocation7 + $0x1d8] sm:$0xff]
    %v508 = vld [vmem:[#allocation7 + $0x1e0] sm:$0xff]
    %v509 = vld [vmem:[#allocation7 + $0x1e8] sm:$0xff]
    %v510 = vld [vmem:[#allocation7 + $0x1f0] sm:$0xff]
    %v511 = vld [vmem:[#allocation7 + $0x1f8] sm:$0xff]
    %v512 = vld [vmem:[#allocation7 + $0x200] sm:$0xff]
    %v513 = vld [vmem:[#allocation7 + $0x208] sm:$0xff]
    %v514 = vld [vmem:[#allocation7 + $0x210] sm:$0xff]
    %v515 = vld [vmem:[#allocation7 + $0x218] sm:$0xff]
    %v516 = vld [vmem:[#allocation7 + $0x220] sm:$0xff]
    %v517 = vld [vmem:[#allocation7 + $0x228] sm:$0xff]
    %v518 = vld [vmem:[#allocation7 + $0x230] sm:$0xff]
    %v519 = vld [vmem:[#allocation7 + $0x238] sm:$0xff]
    %v520 = vld [vmem:[#allocation7 + $0x240] sm:$0xff]
    %v521 = vld [vmem:[#allocation7 + $0x248] sm:$0xff]
    %v522 = vld [vmem:[#allocation7 + $0x250] sm:$0xff]
    %v523 = vld [vmem:[#allocation7 + $0x258] sm:$0xff]
    %v524 = vld [vmem:[#allocation7 + $0x260] sm:$0xff]
    %v525 = vld [vmem:[#allocation7 + $0x268] sm:$0xff]
    %v526 = vld [vmem:[#allocation7 + $0x270] sm:$0xff]
    %v527 = vld [vmem:[#allocation7 + $0x278] sm:$0xff]
    %v528 = vld [vmem:[#allocation7 + $0x280] sm:$0xff]
    %v529 = vld [vmem:[#allocation7 + $0x288] sm:$0xff]
    %v530 = vld [vmem:[#allocation7 + $0x290] sm:$0xff]
    %v531 = vld [vmem:[#allocation7 + $0x298] sm:$0xff]
    %v532 = vld [vmem:[#allocation7 + $0x2a0] sm:$0xff]
    %v533 = vld [vmem:[#allocation7 + $0x2a8] sm:$0xff]
    %v534 = vld [vmem:[#allocation7 + $0x2b0] sm:$0xff]
    %v535 = vld [vmem:[#allocation7 + $0x2b8] sm:$0xff]
    %v536 = vld [vmem:[#allocation7 + $0x2c0] sm:$0xff]
    %v537 = vld [vmem:[#allocation7 + $0x2c8] sm:$0xff]
    %v538 = vld [vmem:[#allocation7 + $0x2d0] sm:$0xff]
    %v539 = vld [vmem:[#allocation7 + $0x2d8] sm:$0xff]
    %v540 = vld [vmem:[#allocation7 + $0x2e0] sm:$0xff]
    %v541 = vld [vmem:[#allocation7 + $0x2e8] sm:$0xff]
    %v542 = vld [vmem:[#allocation7 + $0x2f0] sm:$0xff]
    %v543 = vld [vmem:[#allocation7 + $0x2f8] sm:$0xff]
    %v544 = vld [vmem:[#allocation7 + $0x300] sm:$0xff]
    %v545 = vld [vmem:[#allocation7 + $0x308] sm:$0xff]
    %v546 = vld [vmem:[#allocation7 + $0x310] sm:$0xff]
    %v547 = vld [vmem:[#allocation7 + $0x318] sm:$0xff]
    %v548 = vld [vmem:[#allocation7 + $0x320] sm:$0xff]
    %v549 = vld [vmem:[#allocation7 + $0x328] sm:$0xff]
    %v550 = vld [vmem:[#allocation7 + $0x330] sm:$0xff]
    %v551 = vld [vmem:[#allocation7 + $0x338] sm:$0xff]
    %v552 = vld [vmem:[#allocation7 + $0x340] sm:$0xff]
    %v553 = vld [vmem:[#allocation7 + $0x348] sm:$0xff]
    %v554 = vld [vmem:[#allocation7 + $0x350] sm:$0xff]
    %v555 = vld [vmem:[#allocation7 + $0x358] sm:$0xff]
    %v556 = vld [vmem:[#allocation7 + $0x360] sm:$0xff]
    %v557 = vld [vmem:[#allocation7 + $0x368] sm:$0xff]
    %v558 = vld [vmem:[#allocation7 + $0x370] sm:$0xff]
    %v559 = vld [vmem:[#allocation7 + $0x378] sm:$0xff]
    %v560 = vld [vmem:[#allocation7 + $0x380] sm:$0xff]
    %v561 = vld [vmem:[#allocation7 + $0x388] sm:$0xff]
    %v562 = vld [vmem:[#allocation7 + $0x390] sm:$0xff]
    %v563 = vld [vmem:[#allocation7 + $0x398] sm:$0xff]
    %v564 = vld [vmem:[#allocation7 + $0x3a0] sm:$0xff]
    %v565 = vld [vmem:[#allocation7 + $0x3a8] sm:$0xff]
    %v566 = vld [vmem:[#allocation7 + $0x3b0] sm:$0xff]
    %v567 = vld [vmem:[#allocation7 + $0x3b8] sm:$0xff]
    %v568 = vld [vmem:[#allocation7 + $0x3c0] sm:$0xff]
    %v569 = vld [vmem:[#allocation7 + $0x3c8] sm:$0xff]
    %v570 = vld [vmem:[#allocation7 + $0x3d0] sm:$0xff]
    %v571 = vld [vmem:[#allocation7 + $0x3d8] sm:$0xff]
    %v572 = vld [vmem:[#allocation7 + $0x3e0] sm:$0xff]
    %v573 = vld [vmem:[#allocation7 + $0x3e8] sm:$0xff]
    %v574 = vld [vmem:[#allocation7 + $0x3f0] sm:$0xff]
    %v575 = vld [vmem:[#allocation7 + $0x3f8] sm:$0xff]
    %576 = vmatprep.subr.mxu0 %v479
    %577 = vmatpush1.msra.mxu0 %v478
    %578 = vmatprep.subr.mxu0 %v477
    %579 = vmatpush1.msra.mxu0 %v476
    %580 = vmatprep.subr.mxu0 %v475
    %581 = vmatpush1.msra.mxu0 %v474
    %582 = vmatprep.subr.mxu0 %v473
    %583 = vmatpush1.msra.mxu0 %v472
    %584 = vmatprep.subr.mxu0 %v471
    %585 = vmatpush1.msra.mxu0 %v470
    %586 = vmatprep.subr.mxu0 %v469
    %587 = vmatpush1.msra.mxu0 %v468
    %588 = vmatprep.subr.mxu0 %v467
    %589 = vmatpush1.msra.mxu0 %v466
    %590 = vmatprep.subr.mxu0 %v465
    %591 = vmatpush1.msra.mxu0 %v464
    %592 = vmatprep.subr.mxu0 %v463
    %593 = vmatpush1.msra.mxu0 %v462
    %594 = vmatprep.subr.mxu0 %v461
    %595 = vmatpush1.msra.mxu0 %v460
    %596 = vmatprep.subr.mxu0 %v459
    %597 = vmatpush1.msra.mxu0 %v458
    %598 = vmatprep.subr.mxu0 %v457
    %599 = vmatpush1.msra.mxu0 %v456
    %600 = vmatprep.subr.mxu0 %v455
    %601 = vmatpush1.msra.mxu0 %v454
    %602 = vmatprep.subr.mxu0 %v453
    %603 = vmatpush1.msra.mxu0 %v452
    %604 = vmatprep.subr.mxu0 %v451
    %605 = vmatpush1.msra.mxu0 %v450
    %606 = vmatprep.subr.mxu0 %v449
    %607 = vmatpush1.msra.mxu0 %v448
    %608 = vmatprep.subr.mxu0 %v511
    %609 = vmatpush2.msra.mxu0 %v510
    %610 = vmatprep.subr.mxu0 %v509
    %611 = vmatpush2.msra.mxu0 %v508
    %612 = vmatprep.subr.mxu0 %v507
    %613 = vmatpush2.msra.mxu0 %v506
    %614 = vmatprep.subr.mxu0 %v505
    %615 = vmatpush2.msra.mxu0 %v504
    %616 = vmatprep.subr.mxu0 %v503
    %617 = vmatpush2.msra.mxu0 %v502
    %618 = vmatprep.subr.mxu0 %v501
    %619 = vmatpush2.msra.mxu0 %v500
    %620 = vmatprep.subr.mxu0 %v499
    %621 = vmatpush2.msra.mxu0 %v498
    %622 = vmatprep.subr.mxu0 %v497
    %623 = vmatpush2.msra.mxu0 %v496
    %624 = vmatprep.subr.mxu0 %v495
    %625 = vmatpush2.msra.mxu0 %v494
    %626 = vmatprep.subr.mxu0 %v493
    %627 = vmatpush2.msra.mxu0 %v492
    %628 = vmatprep.subr.mxu0 %v491
    %629 = vmatpush2.msra.mxu0 %v490
    %630 = vmatprep.subr.mxu0 %v489
    %631 = vmatpush2.msra.mxu0 %v488
    %632 = vmatprep.subr.mxu0 %v487
    %633 = vmatpush2.msra.mxu0 %v486
    %634 = vmatprep.subr.mxu0 %v485
    %635 = vmatpush2.msra.mxu0 %v484
    %636 = vmatprep.subr.mxu0 %v483
    %637 = vmatpush2.msra.mxu0 %v482
    %638 = vmatprep.subr.mxu0 %v481
    %639 = vmatpush2.msra.mxu0 %v480
    %640 = vmatprep.mubr.f32.mxu0 %v445
    %641 = vmatmul.mubr.f32.gmra.mxu0 %v444
    %v642 = vpop.f32.mrf.mxu0
    %v643 = vadd.f32 0.0, %v642
    %v644 = vpop.f32.mrf.mxu0
    %v645 = vadd.f32 0.0, %v644
    %646 = vdwg.mxu0
    %647 = vmatprep.subr.mxu0 %v543
    %648 = vmatpush1.msra.mxu0 %v542
    %649 = vmatprep.subr.mxu0 %v541
    %650 = vmatpush1.msra.mxu0 %v540
    %651 = vmatprep.subr.mxu0 %v539
    %652 = vmatpush1.msra.mxu0 %v538
    %653 = vmatprep.subr.mxu0 %v537
    %654 = vmatpush1.msra.mxu0 %v536
    %655 = vmatprep.subr.mxu0 %v535
    %656 = vmatpush1.msra.mxu0 %v534
    %657 = vmatprep.subr.mxu0 %v533
    %658 = vmatpush1.msra.mxu0 %v532
    %659 = vmatprep.subr.mxu0 %v531
    %660 = vmatpush1.msra.mxu0 %v530
    %661 = vmatprep.subr.mxu0 %v529
    %662 = vmatpush1.msra.mxu0 %v528
    %663 = vmatprep.subr.mxu0 %v527
    %664 = vmatpush1.msra.mxu0 %v526
    %665 = vmatprep.subr.mxu0 %v525
    %666 = vmatpush1.msra.mxu0 %v524
    %667 = vmatprep.subr.mxu0 %v523
    %668 = vmatpush1.msra.mxu0 %v522
    %669 = vmatprep.subr.mxu0 %v521
    %670 = vmatpush1.msra.mxu0 %v520
    %671 = vmatprep.subr.mxu0 %v519
    %672 = vmatpush1.msra.mxu0 %v518
    %673 = vmatprep.subr.mxu0 %v517
    %674 = vmatpush1.msra.mxu0 %v516
    %675 = vmatprep.subr.mxu0 %v515
    %676 = vmatpush1.msra.mxu0 %v514
    %677 = vmatprep.subr.mxu0 %v513
    %678 = vmatpush1.msra.mxu0 %v512
    %679 = vmatprep.subr.mxu0 %v575
    %680 = vmatpush2.msra.mxu0 %v574
    %681 = vmatprep.subr.mxu0 %v573
    %682 = vmatpush2.msra.mxu0 %v572
    %683 = vmatprep.subr.mxu0 %v571
    %684 = vmatpush2.msra.mxu0 %v570
    %685 = vmatprep.subr.mxu0 %v569
    %686 = vmatpush2.msra.mxu0 %v568
    %687 = vmatprep.subr.mxu0 %v567
    %688 = vmatpush2.msra.mxu0 %v566
    %689 = vmatprep.subr.mxu0 %v565
    %690 = vmatpush2.msra.mxu0 %v564
    %691 = vmatprep.subr.mxu0 %v563
    %692 = vmatpush2.msra.mxu0 %v562
    %693 = vmatprep.subr.mxu0 %v561
    %694 = vmatpush2.msra.mxu0 %v560
    %695 = vmatprep.subr.mxu0 %v559
    %696 = vmatpush2.msra.mxu0 %v558
    %697 = vmatprep.subr.mxu0 %v557
    %698 = vmatpush2.msra.mxu0 %v556
    %699 = vmatprep.subr.mxu0 %v555
    %700 = vmatpush2.msra.mxu0 %v554
    %701 = vmatprep.subr.mxu0 %v553
    %702 = vmatpush2.msra.mxu0 %v552
    %703 = vmatprep.subr.mxu0 %v551
    %704 = vmatpush2.msra.mxu0 %v550
    %705 = vmatprep.subr.mxu0 %v549
    %706 = vmatpush2.msra.mxu0 %v548
    %707 = vmatprep.subr.mxu0 %v547
    %708 = vmatpush2.msra.mxu0 %v546
    %709 = vmatprep.subr.mxu0 %v545
    %710 = vmatpush2.msra.mxu0 %v544
    %711 = vmatprep.mubr.f32.mxu0 %v447
    %712 = vmatmul.mubr.f32.gmra.mxu0 %v446
    %v713 = vpop.f32.mrf.mxu0
    %v714 = vadd.f32 %v643, %v713
    %v715 = vpop.f32.mrf.mxu0
    %v716 = vadd.f32 %v645, %v715
    %717 = vdwg.mxu0
    %v718 = vrot.slane %v714, 4
    %v719 = vadd.f32 %v714, %v718
    %v720 = vrot.slane %v719, 2
    %v721 = vadd.f32 %v719, %v720
    %v722 = vrot.slane %v721, 1
    %v723 = vadd.f32 %v721, %v722
    %v724 = vrot.slane %v716, 4
    %v725 = vadd.f32 %v716, %v724
    %v726 = vrot.slane %v725, 2
    %v727 = vadd.f32 %v725, %v726
    %v728 = vrot.slane %v727, 1
    %v729 = vadd.f32 %v727, %v728
    %v730 = vmul.f32 %v723, %v277
    %v731 = vmul.f32 %v729, %v277
    %v732 = vmul.f32 %v714, %v714
    %v733 = vmul.f32 %v716, %v716
    %v734 = vrot.slane %v732, 4
    %v735 = vadd.f32 %v732, %v734
    %v736 = vrot.slane %v735, 2
    %v737 = vadd.f32 %v735, %v736
    %v738 = vrot.slane %v737, 1
    %v739 = vadd.f32 %v737, %v738
    %v740 = vrot.slane %v733, 4
    %v741 = vadd.f32 %v733, %v740
    %v742 = vrot.slane %v741, 2
    %v743 = vadd.f32 %v741, %v742
    %v744 = vrot.slane %v743, 1
    %v745 = vadd.f32 %v743, %v744
    %v746 = vmul.f32 %v739, %v277
    %v747 = vmul.f32 %v745, %v277
    %v748 = vmul.f32 %v730, %v730
    %v749 = vmul.f32 %v731, %v731
    %v750 = vsub.f32 %v746, %v748
    %v751 = vsub.f32 %v747, %v749
    %v752 = vadd.f32 %v750, 1e-05
    %v753 = vadd.f32 %v751, 1e-05
    %v754 = vrsqrt.pop %v752
    %v755 = vrsqrt.pop %v753
    %v758 = vcombine.low %v754, %v755
    %v760 = vunpack.c.l.s4 1966171168
    %v761 = vunpack.c.0.s8 %v760
    %v762 = vlaneseq
    %v763 = vshrl.u32 %v762, 7
    %v764 = vsub.s32 %v761, %v763
    %v765 = vrot.slane %v758, %v764
    %v767 = vunpack.c.l.s4 1966171168
    %v768 = vunpack.c.0.s8 %v767
    %v769 = vlaneseq
    %v770 = vshrl.u32 %v769, 7
    %v771 = vsub.s32 %v768, %v770
    %v772 = vrot.slane %v765, %v771
    %v774 = vmul.f32 %v87, %v772
    %v776 = vlaneseq
    %v777 = vshrl.u32 %v776, 7
    %v778 = vsub.s32 0, %v777
    %v779 = vrot.slane %v774, %v778
    %v780 = vlaneseq
    %v781 = vshrl.u32 %v780, 7
    %v782 = vsub.s32 1, %v781
    %v783 = vrot.slane %v774, %v782
    %v786 = vmul.f32 %v730, %v779
    %v787 = vmul.f32 %v731, %v783
    %v790 = vcombine.low %v786, %v787
    %v792 = vunpack.c.l.s4 1966171168
    %v793 = vunpack.c.0.s8 %v792
    %v794 = vlaneseq
    %v795 = vshrl.u32 %v794, 7
    %v796 = vsub.s32 %v793, %v795
    %v797 = vrot.slane %v790, %v796
    %v799 = vunpack.c.l.s4 1966171168
    %v800 = vunpack.c.0.s8 %v799
    %v801 = vlaneseq
    %v802 = vshrl.u32 %v801, 7
    %v803 = vsub.s32 %v800, %v802
    %v804 = vrot.slane %v797, %v803
    %v806 = vsub.f32 %v88, %v804
    %v807 = vmul.f32 %v714, %v779
    %v808 = vmul.f32 %v716, %v783
    %v810 = vlaneseq
    %v811 = vshrl.u32 %v810, 7
    %v812 = vsub.s32 0, %v811
    %v813 = vrot.slane %v806, %v812
    %v814 = vlaneseq
    %v815 = vshrl.u32 %v814, 7
    %v816 = vsub.s32 1, %v815
    %v817 = vrot.slane %v806, %v816
    %v820 = vadd.f32 %v807, %v813
    %v821 = vadd.f32 %v808, %v817
    %v822 = vmax.f32 %v820, 0.0
    %v823 = vmax.f32 %v821, 0.0
    %v824 = vld [vmem:[#allocation8] sm:$0xff]
    %v825 = vld [vmem:[#allocation8 + $0x8] sm:$0xff]
    %v826 = vld [vmem:[#allocation8 + $0x10] sm:$0xff]
    %v827 = vld [vmem:[#allocation8 + $0x18] sm:$0xff]
    %v828 = vld [vmem:[#allocation8 + $0x20] sm:$0xff]
    %v829 = vld [vmem:[#allocation8 + $0x28] sm:$0xff]
    %v830 = vld [vmem:[#allocation8 + $0x30] sm:$0xff]
    %v831 = vld [vmem:[#allocation8 + $0x38] sm:$0xff]
    %v832 = vld [vmem:[#allocation8 + $0x40] sm:$0xff]
    %v833 = vld [vmem:[#allocation8 + $0x48] sm:$0xff]
    %v834 = vld [vmem:[#allocation8 + $0x50] sm:$0xff]
    %v835 = vld [vmem:[#allocation8 + $0x58] sm:$0xff]
    %v836 = vld [vmem:[#allocation8 + $0x60] sm:$0xff]
    %v837 = vld [vmem:[#allocation8 + $0x68] sm:$0xff]
    %v838 = vld [vmem:[#allocation8 + $0x70] sm:$0xff]
    %v839 = vld [vmem:[#allocation8 + $0x78] sm:$0xff]
    %v840 = vld [vmem:[#allocation8 + $0x80] sm:$0xff]
    %v841 = vld [vmem:[#allocation8 + $0x88] sm:$0xff]
    %v842 = vld [vmem:[#allocation8 + $0x90] sm:$0xff]
    %v843 = vld [vmem:[#allocation8 + $0x98] sm:$0xff]
    %v844 = vld [vmem:[#allocation8 + $0xa0] sm:$0xff]
    %v845 = vld [vmem:[#allocation8 + $0xa8] sm:$0xff]
    %v846 = vld [vmem:[#allocation8 + $0xb0] sm:$0xff]
    %v847 = vld [vmem:[#allocation8 + $0xb8] sm:$0xff]
    %v848 = vld [vmem:[#allocation8 + $0xc0] sm:$0xff]
    %v849 = vld [vmem:[#allocation8 + $0xc8] sm:$0xff]
    %v850 = vld [vmem:[#allocation8 + $0xd0] sm:$0xff]
    %v851 = vld [vmem:[#allocation8 + $0xd8] sm:$0xff]
    %v852 = vld [vmem:[#allocation8 + $0xe0] sm:$0xff]
    %v853 = vld [vmem:[#allocation8 + $0xe8] sm:$0xff]
    %v854 = vld [vmem:[#allocation8 + $0xf0] sm:$0xff]
    %v855 = vld [vmem:[#allocation8 + $0xf8] sm:$0xff]
    %v857 = vlaneseq
    %v858 = vshrl.u32 %v857, 7
    %v859 = vsub.s32 0, %v858
    %v860 = vrot.slane %v89, %v859
    %862 = vmatprep.subr.mxu0 0.0
    %863 = vmatpush1.msra.mxu0 %v839
    %864 = vmatprep.subr.mxu0 0.0
    %865 = vmatpush1.msra.mxu0 %v838
    %866 = vmatprep.subr.mxu0 0.0
    %867 = vmatpush1.msra.mxu0 %v837
    %868 = vmatprep.subr.mxu0 0.0
    %869 = vmatpush1.msra.mxu0 %v836
    %870 = vmatprep.subr.mxu0 0.0
    %871 = vmatpush1.msra.mxu0 %v835
    %872 = vmatprep.subr.mxu0 0.0
    %873 = vmatpush1.msra.mxu0 %v834
    %874 = vmatprep.subr.mxu0 0.0
    %875 = vmatpush1.msra.mxu0 %v833
    %876 = vmatprep.subr.mxu0 0.0
    %877 = vmatpush1.msra.mxu0 %v832
    %878 = vmatprep.subr.mxu0 0.0
    %879 = vmatpush1.msra.mxu0 %v831
    %880 = vmatprep.subr.mxu0 0.0
    %881 = vmatpush1.msra.mxu0 %v830
    %882 = vmatprep.subr.mxu0 0.0
    %883 = vmatpush1.msra.mxu0 %v829
    %884 = vmatprep.subr.mxu0 0.0
    %885 = vmatpush1.msra.mxu0 %v828
    %886 = vmatprep.subr.mxu0 0.0
    %887 = vmatpush1.msra.mxu0 %v827
    %888 = vmatprep.subr.mxu0 0.0
    %889 = vmatpush1.msra.mxu0 %v826
    %890 = vmatprep.subr.mxu0 0.0
    %891 = vmatpush1.msra.mxu0 %v825
    %892 = vmatprep.subr.mxu0 0.0
    %893 = vmatpush1.msra.mxu0 %v824
    %894 = vmatprep.subr.mxu0 0.0
    %895 = vmatpush2.msra.mxu0 %v855
    %896 = vmatprep.subr.mxu0 0.0
    %897 = vmatpush2.msra.mxu0 %v854
    %898 = vmatprep.subr.mxu0 0.0
    %899 = vmatpush2.msra.mxu0 %v853
    %900 = vmatprep.subr.mxu0 0.0
    %901 = vmatpush2.msra.mxu0 %v852
    %902 = vmatprep.subr.mxu0 0.0
    %903 = vmatpush2.msra.mxu0 %v851
    %904 = vmatprep.subr.mxu0 0.0
    %905 = vmatpush2.msra.mxu0 %v850
    %906 = vmatprep.subr.mxu0 0.0
    %907 = vmatpush2.msra.mxu0 %v849
    %908 = vmatprep.subr.mxu0 0.0
    %909 = vmatpush2.msra.mxu0 %v848
    %910 = vmatprep.subr.mxu0 0.0
    %911 = vmatpush2.msra.mxu0 %v847
    %912 = vmatprep.subr.mxu0 0.0
    %913 = vmatpush2.msra.mxu0 %v846
    %914 = vmatprep.subr.mxu0 0.0
    %915 = vmatpush2.msra.mxu0 %v845
    %916 = vmatprep.subr.mxu0 0.0
    %917 = vmatpush2.msra.mxu0 %v844
    %918 = vmatprep.subr.mxu0 0.0
    %919 = vmatpush2.msra.mxu0 %v843
    %920 = vmatprep.subr.mxu0 0.0
    %921 = vmatpush2.msra.mxu0 %v842
    %922 = vmatprep.subr.mxu0 0.0
    %923 = vmatpush2.msra.mxu0 %v841
    %924 = vmatprep.subr.mxu0 0.0
    %925 = vmatpush2.msra.mxu0 %v840
    %926 = vmatprep.mubr.f32.mxu0 %v823
    %927 = vmatmul.mubr.f32.gmra.mxu0 %v822
    %v928 = vpop.f32.mrf.mxu0
    %v929 = vadd.f32 %v860, %v928
    %v930 = vpop.f32.mrf.mxu0
    %931 = vdwg.mxu0
    %v932 = vmax.f32 %v929, 0.0
    %933 = vst [vmem:[#allocation11] sm:$0xff] %v932
    // Predicated region
    $region42: #{tpu_custom_call.1} parent=1 // pred_check
      _
    $region43: #{tpu_custom_call.1} parent=1 // pred_check_branch
      %935 = sbr.rel (0) target = $region45
    $region44: #{tpu_custom_call.1} parent=1 // pred_region
      %s937 = ssub.s32 128, 128
      %938 = vsyncadd [#allocation4], %s937
      %s940 = sshll.u32 [#allocation11], 4
      %s941 = int_to_ptr.vmem [resolvable:$true] %s940
      %943 = dma.vmem_to_hbm [thread:$0]  %s941, 128, %s5, [#allocation4]
    $region45: #{tpu_custom_call.1} parent=1 // pred_fallthru
      _
    // Predicated region
    $region46: #{tpu_custom_call.1} parent=1 // pred_check
      _
    $region47: #{tpu_custom_call.1} parent=1 // pred_check_branch
      %945 = sbr.rel (0) target = $region49
    $region48: #{tpu_custom_call.1} parent=1 // pred_region
      %946 = dma.done [#allocation4], 128
    $region49: #{tpu_custom_call.1} parent=1 // pred_fallthru
      _
    %947 = vsyncpa [#allocation3], 1
    %948 = vsyncpa [#allocation6], 1
    %949 = vsyncpa [#allocation9], 1
    %950 = vsyncpa [#allocation4], 1

</llo_original>
